<compile_context>
chip_gen: v5e
topology: v5e:2x2
jax: 0.10.0
libtpu: 0.0.40
codegen_flags: <defaults>
</compile_context>

<pallas_src>
import functools

import jax
import jax.numpy as jnp
from jax import lax
from jax.experimental import pallas as pl
from jax.experimental.pallas import tpu as pltpu

NEG_SLOPE = 0.01     # nn.LeakyReLU() default
BN_EPS = 1e-5


def _leaky(x):
    return jnp.where(x >= 0, x, NEG_SLOPE * x)


# --------------------------------- kernel ---------------------------------
def resunit_kernel(x_ref, halo_ref, w1_ref, b1_ref, w2_ref, b2_ref, o_ref, *, TH, W):
    """One (image, row-tile) per grid step.

    x_ref   : (TH*W, Cin)        f32   centre rows of this tile, (h, w) flattened
    halo_ref: (2*W, Cin)         f32   row above (first W) / row below (last W)
    w1_ref  : (Cin, Cmid)        bf16  1x1 conv weight, BN1 scale folded in
    b1_ref  : (1, Cmid)          f32   folded conv+BN1 bias
    w2_ref  : (3, 3*Cmid, Cout)  bf16  3x3 conv weight, [ky][kx*Cmid+c, o], BN2 folded
    b2_ref  : (1, Cout)          f32   folded conv+BN2 bias
    o_ref   : (TH*W, Cout)       f32
    """
    TW, Cin = x_ref.shape
    Cmid = w1_ref.shape[1]
    j = pl.program_id(1)
    nj = pl.num_programs(1)

    # ---- DBL1: single fused GEMM over [top halo | centre | bottom halo] rows ----
    x_all = jnp.concatenate(
        [halo_ref[0:W, :], x_ref[...], halo_ref[W:2 * W, :]], axis=0)     # ((TH+2)*W, Cin) f32
    h1 = jnp.dot(x_all.astype(jnp.bfloat16), w1_ref[...],
                 preferred_element_type=jnp.float32)
    h1 = _leaky(h1 + b1_ref[...])                                         # ((TH+2)*W, Cmid) f32

    # bf16 intermediate (single cast); zero the out-of-image halo rows — dbl2
    # zero-pads its *input*, so border rows of the intermediate must be exactly 0.
    h1 = h1.reshape(TH + 2, W, Cmid).astype(jnp.bfloat16)
    row = lax.broadcasted_iota(jnp.int32, (TH + 2, 1, 1), 0)
    keep = ((row > 0) | (j > 0)) & ((row <= TH) | (j < nj - 1))
    h1 = jnp.where(keep, h1, 0.0)                                         # (TH+2, W, Cmid) bf16

    # ---- im2col along W: fold the 3 kx taps into the contraction (K = 3*Cmid) ----
    zcol = jnp.zeros((TH + 2, 1, Cmid), jnp.bfloat16)
    s_left = jnp.concatenate([zcol, h1[:, :W - 1, :]], axis=1)            # h1pad[., x+0, :]
    s_right = jnp.concatenate([h1[:, 1:, :], zcol], axis=1)               # h1pad[., x+2, :]
    s = jnp.concatenate([s_left, h1, s_right], axis=-1)                   # (TH+2, W, 3*Cmid)

    # ---- DBL2: 3 GEMMs (one per ky), bf16 in / f32 accumulate ----
    acc = jnp.dot(s[0:TH].reshape(TW, 3 * Cmid), w2_ref[0],
                  preferred_element_type=jnp.float32)
    acc = acc + jnp.dot(s[1:TH + 1].reshape(TW, 3 * Cmid), w2_ref[1],
                        preferred_element_type=jnp.float32)
    acc = acc + jnp.dot(s[2:TH + 2].reshape(TW, 3 * Cmid), w2_ref[2],
                        preferred_element_type=jnp.float32)
    y = _leaky(acc + b2_ref[...])

    # ---- residual add: re-read x from the resident block (short live range) ----
    o_ref[...] = (y + x_ref[...]).astype(o_ref.dtype)


# ------------------------------ wrapper utils ------------------------------
def _fold_bn(gamma, beta, mean, var, conv_bias):
    scale = gamma * jax.lax.rsqrt(var + BN_EPS)
    bias = scale * (conv_bias - mean) + beta
    return scale.astype(jnp.float32), bias.astype(jnp.float32)


def prepare_resunit_params(params):
    """Fold BN into the conv weights/biases and pre-cast to bf16. Call once per
    parameter set (hoisted out of the hot path)."""
    s1, b1 = _fold_bn(params["g1"], params["be1"], params["m1"], params["v1"], params["cb1"])
    s2, b2 = _fold_bn(params["g2"], params["be2"], params["m2"], params["v2"], params["cb2"])
    Cmid = params["w1"].shape[0]
    Cout = params["w2"].shape[0]
    w1 = (jnp.transpose(params["w1"][:, :, 0, 0], (1, 0))                 # (Cin, Cmid)
          * s1[None, :]).astype(jnp.bfloat16)
    w2 = (jnp.transpose(params["w2"], (2, 3, 1, 0))                       # (ky, kx, Cmid, Cout)
          * s2[None, None, None, :]).reshape(3, 3 * Cmid, Cout).astype(jnp.bfloat16)
    return {"w1": w1, "b1": b1.reshape(1, Cmid), "w2": w2, "b2": b2.reshape(1, Cout)}


def _vmem_capacity_bytes():
    cap = 64 * 1024 * 1024            # conservative fallback (v7x per-TC VMEM)
    try:
        cap = int(pltpu.get_tpu_info().vmem_capacity_bytes)
    except Exception:
        pass
    return cap


def _tile_bytes(th, W, Cin, Cmid, Cout):
    f32, bf16 = 4, 2
    blocks = 2 * f32 * (th * W * Cin + 2 * W * Cin + th * W * Cout)   # double-buffered x/halo/out
    weights = 2 * (bf16 * (Cin * Cmid + 9 * Cmid * Cout) + f32 * (Cmid + Cout))
    vals = (f32 * (th + 2) * W * Cin                                   # fused DBL1 operand
            + bf16 * (th + 2) * W * 4 * Cmid                           # h1 + im2col patch (3*Cmid)
            + f32 * th * W * Cout + f32 * (th + 2) * W * Cmid)         # accumulator + f32 h1 transient
    return blocks + weights + vals


def _auto_row_tile(N, H, W, Cin, Cmid, Cout, budget_bytes):
    divs = [d for d in range(H, 0, -1) if H % d == 0]
    cand = [d for d in divs if (d * W) % 8 == 0 or d == H] or divs
    th = next((d for d in cand if _tile_bytes(d, W, Cin, Cmid, Cout) <= budget_bytes), cand[-1])
    # Keep >= 2 parallel grid steps so both TensorCores on v7x megacore get work.
    while N * (H // th) < 2:
        smaller = [d for d in cand if d < th]
        if not smaller:
            break
        th = smaller[0]
    return th


# ------------------------------- entry points -------------------------------
def resunit_pallas_nhwc(x_nhwc, prepared, *, row_tile=None):
    """Core entry point. x_nhwc: (N, H, W, Cin) -> (N, H, W, Cin). No layout transposes."""
    N, H, W, Cin = x_nhwc.shape
    Cmid = prepared["w1"].shape[1]
    Cout = prepared["w2"].shape[2]
    assert Cout == Cin, "ResUnit residual add requires out_channels == in_channels"

    cap = _vmem_capacity_bytes()
    vmem_limit = max(32 * 1024 * 1024, min(cap * 3 // 4, 100 * 1024 * 1024))
    if row_tile is None:
        budget = min(cap * 3 // 8, 48 * 1024 * 1024)
        row_tile = _auto_row_tile(N, H, W, Cin, Cmid, Cout, budget)
    TH = int(row_tile)
    assert H % TH == 0, f"row_tile {TH} must divide H={H}"
    assert (TH * W) % 8 == 0 or TH == H, "row_tile*W must be a multiple of 8"
    n_tiles = H // TH

    x_nhwc = x_nhwc.astype(jnp.float32)

    # Halo rows via a tiny clamped gather (2 rows per tile) — no full padded HBM
    # copy of x. Out-of-image halo rows are zeroed inside the kernel, so the
    # clamped row content at the borders is irrelevant.
    starts = jnp.arange(n_tiles, dtype=jnp.int32) * TH
    top = jnp.take(x_nhwc, jnp.maximum(starts - 1, 0), axis=1)          # (N, n_tiles, W, Cin)
    bot = jnp.take(x_nhwc, jnp.minimum(starts + TH, H - 1), axis=1)
    halo = jnp.concatenate([top, bot], axis=2)                          # (N, n_tiles, 2W, Cin)

    x_flat = x_nhwc.reshape(N, H * W, Cin)                              # free (contiguous)
    kernel = functools.partial(resunit_kernel, TH=TH, W=W)

    out = pl.pallas_call(
        kernel,
        out_shape=jax.ShapeDtypeStruct((N, H * W, Cout), jnp.float32),
        grid_spec=pltpu.PrefetchScalarGridSpec(
            num_scalar_prefetch=0,
            grid=(N, n_tiles),
            in_specs=[
                pl.BlockSpec((None, TH * W, Cin), lambda n, j: (n, j, 0)),
                pl.BlockSpec((None, None, 2 * W, Cin), lambda n, j: (n, j, 0, 0)),
                pl.BlockSpec((Cin, Cmid), lambda n, j: (0, 0)),
                pl.BlockSpec((1, Cmid), lambda n, j: (0, 0)),
                pl.BlockSpec((3, 3 * Cmid, Cout), lambda n, j: (0, 0, 0)),
                pl.BlockSpec((1, Cout), lambda n, j: (0, 0)),
            ],
            out_specs=pl.BlockSpec((None, TH * W, Cout), lambda n, j: (n, j, 0)),
        ),
        compiler_params=pltpu.CompilerParams(
            dimension_semantics=("parallel", "parallel"),
            vmem_limit_bytes=vmem_limit,
        ),
    )(x_flat, halo, prepared["w1"], prepared["b1"], prepared["w2"], prepared["b2"])
    return out.reshape(N, H, W, Cout)


def resunit_pallas(x_nchw, params, *, row_tile=None, prepared=None):
    """NCHW wrapper matching the PyTorch module layout. Callers holding NHWC
    activations should call resunit_pallas_nhwc directly (skips 2 HBM transposes)."""
    if prepared is None:
        prepared = prepare_resunit_params(params)
    x_nhwc = jnp.transpose(x_nchw, (0, 2, 3, 1))
    out_nhwc = resunit_pallas_nhwc(x_nhwc, prepared, row_tile=row_tile)
    return jnp.transpose(out_nhwc, (0, 3, 1, 2))


# --------------------- pure-JAX reference (NCHW, like PyTorch) ---------------------
def resunit_ref(x, p):
    def conv(x, w, b, pad):
        y = jax.lax.conv_general_dilated(
            x, w, (1, 1), [(pad, pad), (pad, pad)],
            dimension_numbers=("NCHW", "OIHW", "NCHW"))
        return y + b[None, :, None, None]

    def bn(y, g, be, m, v):
        return (y - m[None, :, None, None]) / jnp.sqrt(
            v[None, :, None, None] + BN_EPS) * g[None, :, None, None] + be[None, :, None, None]

    h = _leaky(bn(conv(x, p["w1"], p["cb1"], 0), p["g1"], p["be1"], p["m1"], p["v1"]))
    h = _leaky(bn(conv(h, p["w2"], p["cb2"], 1), p["g2"], p["be2"], p["m2"], p["v2"]))
    return h + x


def make_params(key, cin, cout):
    cmid = cin // 2
    ks = jax.random.split(key, 12)
    f32 = jnp.float32
    return {
        "w1": jax.random.normal(ks[0], (cmid, cin, 1, 1), f32) * 0.2,
        "cb1": jax.random.normal(ks[1], (cmid,), f32) * 0.1,
        "g1": 1.0 + 0.1 * jax.random.normal(ks[2], (cmid,), f32),
        "be1": 0.1 * jax.random.normal(ks[3], (cmid,), f32),
        "m1": 0.1 * jax.random.normal(ks[4], (cmid,), f32),
        "v1": 1.0 + 0.1 * jax.random.uniform(ks[5], (cmid,), f32),
        "w2": jax.random.normal(ks[6], (cout, cmid, 3, 3), f32) * 0.2,
        "cb2": jax.random.normal(ks[7], (cout,), f32) * 0.1,
        "g2": 1.0 + 0.1 * jax.random.normal(ks[8], (cout,), f32),
        "be2": 0.1 * jax.random.normal(ks[9], (cout,), f32),
        "m2": 0.1 * jax.random.normal(ks[10], (cout,), f32),
        "v2": 1.0 + 0.1 * jax.random.uniform(ks[11], (cout,), f32),
    }


if __name__ == "__main__":
    key = jax.random.PRNGKey(0)
    kx, kp = jax.random.split(key)

    N, Cin, H, W = 2, 4, 16, 16          # ResUnit(4, 4)
    x = jax.random.normal(kx, (N, Cin, H, W), jnp.float32)
    params = make_params(kp, Cin, Cin)
    prepped = prepare_resunit_params(params)     # hoisted weight prep (once per param set)

    ref = jax.block_until_ready(resunit_ref(x, params))

    # bf16 matmul operands with f32 accumulation -> loosened tolerance vs f32 reference.
    for rt in (8, 16, None):             # multi-tile (halo exchange), single-tile, auto-tile
        out = jax.block_until_ready(resunit_pallas(x, params, row_tile=rt, prepared=prepped))
        assert out.shape == x.shape and out.dtype == jnp.float32
        err = float(jnp.max(jnp.abs(out - ref)))
        assert jnp.allclose(out, ref, atol=3e-2, rtol=3e-2), (rt, err)

    print("KERNEL_OK")
</pallas_src>

<mosaic_0001>
module attributes {stable_mosaic.version = 11 : i64} {
  func.func @resunit_kernel(%arg0: i32, %arg1: i32, %arg2: memref<1x128x4xf32, #tpu.memory_space<vmem>>, %arg3: memref<1x1x32x4xf32, #tpu.memory_space<vmem>>, %arg4: memref<4x2xbf16, #tpu.memory_space<vmem>>, %arg5: memref<1x2xf32, #tpu.memory_space<vmem>>, %arg6: memref<3x6x4xbf16, #tpu.memory_space<vmem>>, %arg7: memref<1x4xf32, #tpu.memory_space<vmem>>, %arg8: memref<1x128x4xf32, #tpu.memory_space<vmem>>) attributes {dimension_semantics = [#tpu.dimension_semantics<parallel>, #tpu.dimension_semantics<parallel>], iteration_bounds = array<i64: 2, 2>, scalar_prefetch = 0 : i64, scratch_operands = 0 : i64, tpu.core_type = #tpu.core_type<tc>, window_params = [{transform_indices = @transform_0, window_bounds = array<i64: 1, 128, 4>}, {transform_indices = @transform_1, window_bounds = array<i64: 1, 1, 32, 4>}, {pipeline_mode = #tpu.pipeline_mode<synchronous>, transform_indices = @transform_2, window_bounds = array<i64: 4, 2>}, {pipeline_mode = #tpu.pipeline_mode<synchronous>, transform_indices = @transform_3, window_bounds = array<i64: 1, 2>}, {pipeline_mode = #tpu.pipeline_mode<synchronous>, transform_indices = @transform_4, window_bounds = array<i64: 3, 6, 4>}, {pipeline_mode = #tpu.pipeline_mode<synchronous>, transform_indices = @transform_5, window_bounds = array<i64: 1, 4>}, {transform_indices = @transform_6, window_bounds = array<i64: 1, 128, 4>}]} {
    %c0 = arith.constant 0 : index
    %c0_0 = arith.constant 0 : index
    %c0_1 = arith.constant 0 : index
    %c0_2 = arith.constant 0 : index
    %0 = vector.load %arg3[%c0, %c0_0, %c0_1, %c0_2] : memref<1x1x32x4xf32, #tpu.memory_space<vmem>>, vector<1x1x16x4xf32>
    %1 = vector.shape_cast %0 : vector<1x1x16x4xf32> to vector<16x4xf32>
    %c0_3 = arith.constant 0 : index
    %c0_4 = arith.constant 0 : index
    %c0_5 = arith.constant 0 : index
    %2 = vector.load %arg2[%c0_3, %c0_4, %c0_5] : memref<1x128x4xf32, #tpu.memory_space<vmem>>, vector<1x128x4xf32>
    %3 = vector.shape_cast %2 : vector<1x128x4xf32> to vector<128x4xf32>
    %c0_6 = arith.constant 0 : index
    %c0_7 = arith.constant 0 : index
    %c16 = arith.constant 16 : index
    %c0_8 = arith.constant 0 : index
    %4 = vector.load %arg3[%c0_6, %c0_7, %c16, %c0_8] : memref<1x1x32x4xf32, #tpu.memory_space<vmem>>, vector<1x1x16x4xf32>
    %5 = vector.shape_cast %4 : vector<1x1x16x4xf32> to vector<16x4xf32>
    %6 = tpu.concatenate %1, %3, %5 in 0 : vector<16x4xf32>, vector<128x4xf32>, vector<16x4xf32> -> vector<160x4xf32>
    %7 = arith.truncf %6 : vector<160x4xf32> to vector<160x4xbf16>
    %c0_9 = arith.constant 0 : index
    %c0_10 = arith.constant 0 : index
    %8 = vector.load %arg4[%c0_9, %c0_10] : memref<4x2xbf16, #tpu.memory_space<vmem>>, vector<4x2xbf16>
    %cst = arith.constant dense<0.000000e+00> : vector<160x2xf32>
    %9 = tpu.matmul %7, %8, %cst {dimension_numbers = #tpu.dot_dimension_numbers<[1], [0], [0], [1], [0, 0, 1, 1], [], []>} : vector<160x4xbf16>, vector<4x2xbf16>, vector<160x2xf32> -> vector<160x2xf32>
    %c0_11 = arith.constant 0 : index
    %c0_12 = arith.constant 0 : index
    %10 = vector.load %arg5[%c0_11, %c0_12] : memref<1x2xf32, #tpu.memory_space<vmem>>, vector<1x2xf32>
    %11 = vector.broadcast %10 : vector<1x2xf32> to vector<160x2xf32>
    %12 = arith.addf %9, %11 : vector<160x2xf32>
    %cst_13 = arith.constant 0.000000e+00 : f32
    %13 = vector.broadcast %cst_13 : f32 to vector<160x2xf32>
    %14 = arith.cmpf oge, %12, %13 : vector<160x2xf32>
    %cst_14 = arith.constant 0.00999999977 : f32
    %15 = vector.broadcast %cst_14 : f32 to vector<160x2xf32>
    %16 = arith.mulf %15, %12 : vector<160x2xf32>
    %17 = arith.select %14, %12, %16 : vector<160x2xi1>, vector<160x2xf32>
    %18 = vector.shape_cast %17 : vector<160x2xf32> to vector<10x16x2xf32>
    %19 = arith.truncf %18 : vector<10x16x2xf32> to vector<10x16x2xbf16>
    %20 = tpu.iota {dimensions = array<i32: 0>} : vector<10x1x1xi32>
    %c0_i32 = arith.constant 0 : i32
    %21 = vector.broadcast %c0_i32 : i32 to vector<10x1x1xi32>
    %22 = arith.cmpi sgt, %20, %21 : vector<10x1x1xi32>
    %c0_i32_15 = arith.constant 0 : i32
    %23 = arith.cmpi sgt, %arg1, %c0_i32_15 : i32
    %24 = vector.broadcast %23 : i1 to vector<10x1x1xi1>
    %25 = arith.ori %22, %24 : vector<10x1x1xi1>
    %c8_i32 = arith.constant 8 : i32
    %26 = vector.broadcast %c8_i32 : i32 to vector<10x1x1xi32>
    %27 = arith.cmpi sle, %20, %26 : vector<10x1x1xi32>
    %c1_i32 = arith.constant 1 : i32
    %28 = arith.cmpi slt, %arg1, %c1_i32 : i32
    %29 = vector.broadcast %28 : i1 to vector<10x1x1xi1>
    %30 = arith.ori %27, %29 : vector<10x1x1xi1>
    %31 = arith.andi %25, %30 : vector<10x1x1xi1>
    %cst_16 = arith.constant 0.000000e+00 : f32
    %32 = arith.truncf %cst_16 : f32 to bf16
    %33 = vector.shape_cast %31 : vector<10x1x1xi1> to vector<10x1x1xi1>
    %34 = vector.broadcast %33 : vector<10x1x1xi1> to vector<10x16x2xi1>
    %35 = vector.broadcast %32 : bf16 to vector<10x16x2xbf16>
    %36 = arith.select %34, %19, %35 : vector<10x16x2xi1>, vector<10x16x2xbf16>
    %cst_17 = arith.constant 0.000000e+00 : bf16
    %37 = vector.broadcast %cst_17 : bf16 to vector<10x1x2xbf16>
    %38 = vector.extract_strided_slice %36 {offsets = [0, 0, 0], sizes = [10, 15, 2], strides = [1, 1, 1]} : vector<10x16x2xbf16> to vector<10x15x2xbf16>
    %39 = tpu.concatenate %37, %38 in 1 : vector<10x1x2xbf16>, vector<10x15x2xbf16> -> vector<10x16x2xbf16>
    %40 = vector.extract_strided_slice %36 {offsets = [0, 1, 0], sizes = [10, 15, 2], strides = [1, 1, 1]} : vector<10x16x2xbf16> to vector<10x15x2xbf16>
    %41 = tpu.concatenate %40, %37 in 1 : vector<10x15x2xbf16>, vector<10x1x2xbf16> -> vector<10x16x2xbf16>
    %42 = tpu.concatenate %39, %36, %41 in 2 : vector<10x16x2xbf16>, vector<10x16x2xbf16>, vector<10x16x2xbf16> -> vector<10x16x6xbf16>
    %43 = vector.extract_strided_slice %42 {offsets = [0, 0, 0], sizes = [8, 16, 6], strides = [1, 1, 1]} : vector<10x16x6xbf16> to vector<8x16x6xbf16>
    %44 = vector.shape_cast %43 : vector<8x16x6xbf16> to vector<128x6xbf16>
    %c0_18 = arith.constant 0 : index
    %c0_19 = arith.constant 0 : index
    %c0_20 = arith.constant 0 : index
    %45 = vector.load %arg6[%c0_18, %c0_19, %c0_20] : memref<3x6x4xbf16, #tpu.memory_space<vmem>>, vector<1x6x4xbf16>
    %46 = vector.shape_cast %45 : vector<1x6x4xbf16> to vector<6x4xbf16>
    %cst_21 = arith.constant dense<0.000000e+00> : vector<128x4xf32>
    %47 = tpu.matmul %44, %46, %cst_21 {dimension_numbers = #tpu.dot_dimension_numbers<[1], [0], [0], [1], [0, 0, 1, 1], [], []>} : vector<128x6xbf16>, vector<6x4xbf16>, vector<128x4xf32> -> vector<128x4xf32>
    %48 = vector.extract_strided_slice %42 {offsets = [1, 0, 0], sizes = [8, 16, 6], strides = [1, 1, 1]} : vector<10x16x6xbf16> to vector<8x16x6xbf16>
    %49 = vector.shape_cast %48 : vector<8x16x6xbf16> to vector<128x6xbf16>
    %c1 = arith.constant 1 : index
    %c0_22 = arith.constant 0 : index
    %c0_23 = arith.constant 0 : index
    %50 = vector.load %arg6[%c1, %c0_22, %c0_23] : memref<3x6x4xbf16, #tpu.memory_space<vmem>>, vector<1x6x4xbf16>
    %51 = vector.shape_cast %50 : vector<1x6x4xbf16> to vector<6x4xbf16>
    %cst_24 = arith.constant dense<0.000000e+00> : vector<128x4xf32>
    %52 = tpu.matmul %49, %51, %cst_24 {dimension_numbers = #tpu.dot_dimension_numbers<[1], [0], [0], [1], [0, 0, 1, 1], [], []>} : vector<128x6xbf16>, vector<6x4xbf16>, vector<128x4xf32> -> vector<128x4xf32>
    %53 = arith.addf %47, %52 : vector<128x4xf32>
    %54 = vector.extract_strided_slice %42 {offsets = [2, 0, 0], sizes = [8, 16, 6], strides = [1, 1, 1]} : vector<10x16x6xbf16> to vector<8x16x6xbf16>
    %55 = vector.shape_cast %54 : vector<8x16x6xbf16> to vector<128x6xbf16>
    %c2 = arith.constant 2 : index
    %c0_25 = arith.constant 0 : index
    %c0_26 = arith.constant 0 : index
    %56 = vector.load %arg6[%c2, %c0_25, %c0_26] : memref<3x6x4xbf16, #tpu.memory_space<vmem>>, vector<1x6x4xbf16>
    %57 = vector.shape_cast %56 : vector<1x6x4xbf16> to vector<6x4xbf16>
    %cst_27 = arith.constant dense<0.000000e+00> : vector<128x4xf32>
    %58 = tpu.matmul %55, %57, %cst_27 {dimension_numbers = #tpu.dot_dimension_numbers<[1], [0], [0], [1], [0, 0, 1, 1], [], []>} : vector<128x6xbf16>, vector<6x4xbf16>, vector<128x4xf32> -> vector<128x4xf32>
    %59 = arith.addf %53, %58 : vector<128x4xf32>
    %c0_28 = arith.constant 0 : index
    %c0_29 = arith.constant 0 : index
    %60 = vector.load %arg7[%c0_28, %c0_29] : memref<1x4xf32, #tpu.memory_space<vmem>>, vector<1x4xf32>
    %61 = vector.broadcast %60 : vector<1x4xf32> to vector<128x4xf32>
    %62 = arith.addf %59, %61 : vector<128x4xf32>
    %cst_30 = arith.constant 0.000000e+00 : f32
    %63 = vector.broadcast %cst_30 : f32 to vector<128x4xf32>
    %64 = arith.cmpf oge, %62, %63 : vector<128x4xf32>
    %cst_31 = arith.constant 0.00999999977 : f32
    %65 = vector.broadcast %cst_31 : f32 to vector<128x4xf32>
    %66 = arith.mulf %65, %62 : vector<128x4xf32>
    %67 = arith.select %64, %62, %66 : vector<128x4xi1>, vector<128x4xf32>
    %c0_32 = arith.constant 0 : index
    %c0_33 = arith.constant 0 : index
    %c0_34 = arith.constant 0 : index
    %68 = vector.load %arg2[%c0_32, %c0_33, %c0_34] : memref<1x128x4xf32, #tpu.memory_space<vmem>>, vector<1x128x4xf32>
    %69 = vector.shape_cast %68 : vector<1x128x4xf32> to vector<128x4xf32>
    %70 = arith.addf %67, %69 : vector<128x4xf32>
    %c0_35 = arith.constant 0 : index
    %c0_36 = arith.constant 0 : index
    %c0_37 = arith.constant 0 : index
    %71 = vector.load %arg8[%c0_35, %c0_36, %c0_37] : memref<1x128x4xf32, #tpu.memory_space<vmem>>, vector<1x128x4xf32>
    %72 = vector.shape_cast %71 : vector<1x128x4xf32> to vector<128x4xf32>
    %73 = vector.shape_cast %70 : vector<128x4xf32> to vector<1x128x4xf32>
    tpu.vector_store %arg8[%c0_35, %c0_36, %c0_37], %73 {strides = array<i32>} : memref<1x128x4xf32, #tpu.memory_space<vmem>>, vector<1x128x4xf32>,
    return
  }
  func.func @transform_0(%arg0: i32, %arg1: i32) -> (i32, i32, i32) {
    %c0_i32 = arith.constant 0 : i32
    %c0_i32_0 = arith.constant 0 : i32
    return %arg0, %arg1, %c0_i32 : i32, i32, i32
  }
  func.func @transform_1(%arg0: i32, %arg1: i32) -> (i32, i32, i32, i32) {
    %c0_i32 = arith.constant 0 : i32
    %c0_i32_0 = arith.constant 0 : i32
    %c0_i32_1 = arith.constant 0 : i32
    return %arg0, %arg1, %c0_i32, %c0_i32_0 : i32, i32, i32, i32
  }
  func.func @transform_2(%arg0: i32, %arg1: i32) -> (i32, i32) {
    %c0_i32 = arith.constant 0 : i32
    %c0_i32_0 = arith.constant 0 : i32
    %c0_i32_1 = arith.constant 0 : i32
    return %c0_i32, %c0_i32_0 : i32, i32
  }
  func.func @transform_3(%arg0: i32, %arg1: i32) -> (i32, i32) {
    %c0_i32 = arith.constant 0 : i32
    %c0_i32_0 = arith.constant 0 : i32
    %c0_i32_1 = arith.constant 0 : i32
    return %c0_i32, %c0_i32_0 : i32, i32
  }
  func.func @transform_4(%arg0: i32, %arg1: i32) -> (i32, i32, i32) {
    %c0_i32 = arith.constant 0 : i32
    %c0_i32_0 = arith.constant 0 : i32
    %c0_i32_1 = arith.constant 0 : i32
    %c0_i32_2 = arith.constant 0 : i32
    return %c0_i32, %c0_i32_0, %c0_i32_1 : i32, i32, i32
  }
  func.func @transform_5(%arg0: i32, %arg1: i32) -> (i32, i32) {
    %c0_i32 = arith.constant 0 : i32
    %c0_i32_0 = arith.constant 0 : i32
    %c0_i32_1 = arith.constant 0 : i32
    return %c0_i32, %c0_i32_0 : i32, i32
  }
  func.func @transform_6(%arg0: i32, %arg1: i32) -> (i32, i32, i32) {
    %c0_i32 = arith.constant 0 : i32
    %c0_i32_0 = arith.constant 0 : i32
    return %arg0, %arg1, %c0_i32 : i32, i32, i32
  }
}

</mosaic_0001>

<llo_original>
// kernel: tpu_custom_call.1
$region0: #{tpu_custom_call.1}
  #allocation0 [shape = 'u32[]', space=smem, size = 0x4, offset = 0x4, fixed_abs, tag = 'smem constant byte address 0x4 - core index']
  #allocation1 [shape = 'u32[72,128]{1,0:T(1,128)}', space=vmem, size = 0x9000, scoped, tag = 'internal scratch']
  %s0 = inlined_call_operand.vmem [shape: f32[2,256,4], index: 0, kind: input, shape index: {}]
  %s1 = inlined_call_operand.vmem [shape: f32[2,2,32,4], index: 1, kind: input, shape index: {}]
  %s2 = inlined_call_operand.vmem [shape: bf16[4,2], index: 2, kind: input, shape index: {}]
  %s3 = inlined_call_operand.vmem [shape: f32[1,2], index: 3, kind: input, shape index: {}]
  %s4 = inlined_call_operand.vmem [shape: bf16[3,6,4], index: 4, kind: input, shape index: {}]
  %s5 = inlined_call_operand.vmem [shape: f32[1,4], index: 5, kind: input, shape index: {}]
  %s6 = inlined_call_operand.vmem [shape: f32[2,256,4], index: 6, kind: output, shape index: {}]
  %s7 = sld [smem:[#allocation0]]
  $region57: #{tpu_custom_call.1} parent=0
    _
  %s9 = ssub.s32 1, %s7
  %s10 = scalar_select 0, %s9, %s7
  loop: start=0, step=1, limit=6
  $region2: #{tpu_custom_call.1} parent=0 // loop_pre_header
    _
  $region3: #{tpu_custom_call.1} parent=0 // loop_header
    %s12 = sphi 0, %s16
    %p13 = scmp.ge.s32.totalorder %s12, 6
    %s19 = sphi 0, %s31
    %s20 = sphi 0, %s27
    %s21 = sphi 0, %s19
    %s22 = sphi 0, %s20
    %s23 = sphi 0, %s21
    %s24 = sphi 0, %s22
    %s36 = sphi 0, %s38
    %s39 = sphi 0, %s36
    %s40 = sphi 0, %s39
    %s56 = sphi 0, %s40
    %s64 = sphi 0, %s66
    %s67 = sphi 0, %s64
    %s68 = sphi 0, %s67
    %s84 = sphi 0, %s68
    %s88 = sphi 0, %s88
    %s90 = sphi 0, %s88
    %s91 = sphi 0, %s90
    %s105 = sphi 0, %s91
    %s109 = sphi 0, %s109
    %s111 = sphi 0, %s109
    %s112 = sphi 0, %s111
    %s126 = sphi 0, %s112
    %s130 = sphi 0, %s130
    %s132 = sphi 0, %s130
    %s133 = sphi 0, %s132
    %s147 = sphi 0, %s133
    %s151 = sphi 0, %s151
    %s153 = sphi 0, %s151
    %s154 = sphi 0, %s153
    %s168 = sphi 0, %s154
    %s176 = sphi 0, %s178
    %s179 = sphi 0, %s176
    %s180 = sphi 0, %s179
    %s196 = sphi 0, %s180
  $region4: #{tpu_custom_call.1} parent=0 // loop_header_branch
    %15 = sbr.rel (%p13) target = $region8
  $region5: #{tpu_custom_call.1} parent=0 // loop_body
    %s17 = ssub.s32 %s12, 1
    %s18 = ssub.s32 %s12, 2
    %s25 = sadd.s32 1, %s20
    %p26 = scmp.ge.s32.totalorder %s25, 2
    %s27 = scalar_select %p26, 0, %s25
    %s28 = sadd.s32 1, %s19
    %s29 = scalar_select %p26, %s28, %s19
    %p30 = scmp.ge.s32.totalorder %s29, 2
    %s31 = scalar_select %p30, 0, %s29
    %s32 = ssub.s32 %s19, %s31
    %s33 = ssub.s32 %s20, %s27
    %s34 = sor.u32 %s32, %s33
    %p35 = scmp.eq.s32.totalorder %s34, 0
    %s37 = sadd.s32 %s36, 1
    %s38 = scalar_select %p35, %s36, %s37
    %p41 = pneg %p35
    %p42 = scmp.eq.s32.totalorder %s12, 3
    %p43 = por %p41, %p42
    %p44 = scmp.ne.s32.totalorder %s36, %s39
    %p45 = scmp.eq.s32.totalorder %s12, 0
    %p46 = por %p44, %p45
    %p47 = scmp.ne.s32.totalorder %s36, %s39
    %p48 = scmp.eq.s32.totalorder %s17, 3
    %p49 = por %p47, %p48
    %p50 = scmp.ne.s32.totalorder %s39, %s40
    %p51 = scmp.eq.s32.totalorder %s17, 0
    %p52 = por %p50, %p51
    %p53 = scmp.ne.s32.totalorder %s39, %s40
    %p54 = scmp.eq.s32.totalorder %s18, 3
    %p55 = por %p53, %p54
    %p57 = scmp.ne.s32.totalorder %s40, %s56
    %p58 = scmp.eq.s32.totalorder %s18, 0
    %p59 = por %p57, %p58
    %s60 = ssub.s32 %s19, %s31
    %s61 = ssub.s32 %s20, %s27
    %s62 = sor.u32 %s60, %s61
    %p63 = scmp.eq.s32.totalorder %s62, 0
    %s65 = sadd.s32 %s64, 1
    %s66 = scalar_select %p63, %s64, %s65
    %p69 = pneg %p63
    %p70 = scmp.eq.s32.totalorder %s12, 3
    %p71 = por %p69, %p70
    %p72 = scmp.ne.s32.totalorder %s64, %s67
    %p73 = scmp.eq.s32.totalorder %s12, 0
    %p74 = por %p72, %p73
    %p75 = scmp.ne.s32.totalorder %s64, %s67
    %p76 = scmp.eq.s32.totalorder %s17, 3
    %p77 = por %p75, %p76
    %p78 = scmp.ne.s32.totalorder %s67, %s68
    %p79 = scmp.eq.s32.totalorder %s17, 0
    %p80 = por %p78, %p79
    %p81 = scmp.ne.s32.totalorder %s67, %s68
    %p82 = scmp.eq.s32.totalorder %s18, 3
    %p83 = por %p81, %p82
    %p85 = scmp.ne.s32.totalorder %s68, %s84
    %p86 = scmp.eq.s32.totalorder %s18, 0
    %p87 = por %p85, %p86
    %s89 = sadd.s32 %s88, 1
    %p92 = scmp.eq.s32.totalorder %s12, 3
    %p93 = scmp.ne.s32.totalorder %s88, %s90
    %p94 = scmp.eq.s32.totalorder %s12, 0
    %p95 = por %p93, %p94
    %p96 = scmp.ne.s32.totalorder %s88, %s90
    %p97 = scmp.eq.s32.totalorder %s17, 3
    %p98 = por %p96, %p97
    %p99 = scmp.ne.s32.totalorder %s90, %s91
    %p100 = scmp.eq.s32.totalorder %s17, 0
    %p101 = por %p99, %p100
    %p102 = scmp.ne.s32.totalorder %s90, %s91
    %p103 = scmp.eq.s32.totalorder %s18, 3
    %p104 = por %p102, %p103
    %p106 = scmp.ne.s32.totalorder %s91, %s105
    %p107 = scmp.eq.s32.totalorder %s18, 0
    %p108 = por %p106, %p107
    %s110 = sadd.s32 %s109, 1
    %p113 = scmp.eq.s32.totalorder %s12, 3
    %p114 = scmp.ne.s32.totalorder %s109, %s111
    %p115 = scmp.eq.s32.totalorder %s12, 0
    %p116 = por %p114, %p115
    %p117 = scmp.ne.s32.totalorder %s109, %s111
    %p118 = scmp.eq.s32.totalorder %s17, 3
    %p119 = por %p117, %p118
    %p120 = scmp.ne.s32.totalorder %s111, %s112
    %p121 = scmp.eq.s32.totalorder %s17, 0
    %p122 = por %p120, %p121
    %p123 = scmp.ne.s32.totalorder %s111, %s112
    %p124 = scmp.eq.s32.totalorder %s18, 3
    %p125 = por %p123, %p124
    %p127 = scmp.ne.s32.totalorder %s112, %s126
    %p128 = scmp.eq.s32.totalorder %s18, 0
    %p129 = por %p127, %p128
    %s131 = sadd.s32 %s130, 1
    %p134 = scmp.eq.s32.totalorder %s12, 3
    %p135 = scmp.ne.s32.totalorder %s130, %s132
    %p136 = scmp.eq.s32.totalorder %s12, 0
    %p137 = por %p135, %p136
    %p138 = scmp.ne.s32.totalorder %s130, %s132
    %p139 = scmp.eq.s32.totalorder %s17, 3
    %p140 = por %p138, %p139
    %p141 = scmp.ne.s32.totalorder %s132, %s133
    %p142 = scmp.eq.s32.totalorder %s17, 0
    %p143 = por %p141, %p142
    %p144 = scmp.ne.s32.totalorder %s132, %s133
    %p145 = scmp.eq.s32.totalorder %s18, 3
    %p146 = por %p144, %p145
    %p148 = scmp.ne.s32.totalorder %s133, %s147
    %p149 = scmp.eq.s32.totalorder %s18, 0
    %p150 = por %p148, %p149
    %s152 = sadd.s32 %s151, 1
    %p155 = scmp.eq.s32.totalorder %s12, 3
    %p156 = scmp.ne.s32.totalorder %s151, %s153
    %p157 = scmp.eq.s32.totalorder %s12, 0
    %p158 = por %p156, %p157
    %p159 = scmp.ne.s32.totalorder %s151, %s153
    %p160 = scmp.eq.s32.totalorder %s17, 3
    %p161 = por %p159, %p160
    %p162 = scmp.ne.s32.totalorder %s153, %s154
    %p163 = scmp.eq.s32.totalorder %s17, 0
    %p164 = por %p162, %p163
    %p165 = scmp.ne.s32.totalorder %s153, %s154
    %p166 = scmp.eq.s32.totalorder %s18, 3
    %p167 = por %p165, %p166
    %p169 = scmp.ne.s32.totalorder %s154, %s168
    %p170 = scmp.eq.s32.totalorder %s18, 0
    %p171 = por %p169, %p170
    %s172 = ssub.s32 %s19, %s31
    %s173 = ssub.s32 %s20, %s27
    %s174 = sor.u32 %s172, %s173
    %p175 = scmp.eq.s32.totalorder %s174, 0
    %s177 = sadd.s32 %s176, 1
    %s178 = scalar_select %p175, %s176, %s177
    %p181 = pneg %p175
    %p182 = scmp.eq.s32.totalorder %s12, 3
    %p183 = por %p181, %p182
    %p184 = scmp.ne.s32.totalorder %s176, %s179
    %p185 = scmp.eq.s32.totalorder %s12, 0
    %p186 = por %p184, %p185
    %p187 = scmp.ne.s32.totalorder %s176, %s179
    %p188 = scmp.eq.s32.totalorder %s17, 3
    %p189 = por %p187, %p188
    %p190 = scmp.ne.s32.totalorder %s179, %s180
    %p191 = scmp.eq.s32.totalorder %s17, 0
    %p192 = por %p190, %p191
    %p193 = scmp.ne.s32.totalorder %s179, %s180
    %p194 = scmp.eq.s32.totalorder %s18, 3
    %p195 = por %p193, %p194
    %p197 = scmp.ne.s32.totalorder %s180, %s196
    %p198 = scmp.eq.s32.totalorder %s18, 0
    %p199 = por %p197, %p198
    %p200 = scmp.le.s32.totalorder 1, %s12
    %p201 = scmp.lt.s32.totalorder %s12, 5
    %p202 = pnand %p200, %p201
    %p203 = pneg %p202
    // Predicated region
    $region9: #{tpu_custom_call.1} parent=5 // pred_check
      _
    $region10: #{tpu_custom_call.1} parent=5 // pred_check_branch
      %205 = sbr.rel (%p202) target = $region12
    $region11: #{tpu_custom_call.1} parent=5 // pred_region
      %s206 = ssub.s32 %s12, 1
      // Predicated region
      $region13: #{tpu_custom_call.1} parent=11 // pred_check
        %p207 = pneg %p101
      $region14: #{tpu_custom_call.1} parent=11 // pred_check_branch
        %209 = sbr.rel (%p207) target = $region16
      $region15: #{tpu_custom_call.1} parent=11 // pred_region
        _
      $region16: #{tpu_custom_call.1} parent=11 // pred_fallthru
        _
      // Predicated region
      $region17: #{tpu_custom_call.1} parent=11 // pred_check
        %p210 = pneg %p122
      $region18: #{tpu_custom_call.1} parent=11 // pred_check_branch
        %212 = sbr.rel (%p210) target = $region20
      $region19: #{tpu_custom_call.1} parent=11 // pred_region
        _
      $region20: #{tpu_custom_call.1} parent=11 // pred_fallthru
        _
      // Predicated region
      $region21: #{tpu_custom_call.1} parent=11 // pred_check
        %p213 = pneg %p143
      $region22: #{tpu_custom_call.1} parent=11 // pred_check_branch
        %215 = sbr.rel (%p213) target = $region24
      $region23: #{tpu_custom_call.1} parent=11 // pred_region
        _
      $region24: #{tpu_custom_call.1} parent=11 // pred_fallthru
        _
      // Predicated region
      $region25: #{tpu_custom_call.1} parent=11 // pred_check
        %p216 = pneg %p164
      $region26: #{tpu_custom_call.1} parent=11 // pred_check_branch
        %218 = sbr.rel (%p216) target = $region28
      $region27: #{tpu_custom_call.1} parent=11 // pred_region
        _
      $region28: #{tpu_custom_call.1} parent=11 // pred_fallthru
        _
    $region12: #{tpu_custom_call.1} parent=5 // pred_fallthru
      _
    %p219 = scmp.lt.s32.totalorder %s12, 4
    // Predicated region
    $region29: #{tpu_custom_call.1} parent=5 // pred_check
      %p220 = pneg %p219
    $region30: #{tpu_custom_call.1} parent=5 // pred_check_branch
      %222 = sbr.rel (%p220) target = $region32
    $region31: #{tpu_custom_call.1} parent=5 // pred_region
      // Predicated region
      $region33: #{tpu_custom_call.1} parent=31 // pred_check
        %p223 = pneg %p46
      $region34: #{tpu_custom_call.1} parent=31 // pred_check_branch
        %225 = sbr.rel (%p223) target = $region36
      $region35: #{tpu_custom_call.1} parent=31 // pred_region
        %s226 = smul.u32 16, %s20
        %p227 = scmp.lt.s32.totalorder %s19, 1
        %s228 = scalar_select %p227, %s19, 1
        %p229 = scmp.lt.s32.totalorder %s226, 31
        %s230 = scalar_select %p229, %s226, 31
        %s231 = smul.addr %s228, 32
        %s232 = sadd.s32 %s230, %s231
        %s233 = smul.addr %s232, 8
        %s234 = scalar_lea.vmem %s0, %s233
        %s235 = smul.u32 16, %s20
      $region36: #{tpu_custom_call.1} parent=31 // pred_fallthru
        _
      // Predicated region
      $region37: #{tpu_custom_call.1} parent=31 // pred_check
        %p236 = pneg %p74
      $region38: #{tpu_custom_call.1} parent=31 // pred_check_branch
        %238 = sbr.rel (%p236) target = $region40
      $region39: #{tpu_custom_call.1} parent=31 // pred_region
        %p239 = scmp.lt.s32.totalorder %s19, 1
        %s240 = scalar_select %p239, %s19, 1
        %p241 = scmp.lt.s32.totalorder %s20, 1
        %s242 = scalar_select %p241, %s20, 1
        %s243 = smul.addr %s242, 4
        %s244 = smul.addr %s240, 8
        %s245 = sadd.s32 %s243, %s244
        %s246 = smul.addr %s245, 8
        %s247 = scalar_lea.vmem %s1, %s246
      $region40: #{tpu_custom_call.1} parent=31 // pred_fallthru
        _
    $region32: #{tpu_custom_call.1} parent=5 // pred_fallthru
      _
    %p248 = scmp.le.s32.totalorder 1, %s12
    %p249 = scmp.lt.s32.totalorder %s12, 5
    %p250 = pnand %p248, %p249
    %p251 = pneg %p250
    // Predicated region
    $region41: #{tpu_custom_call.1} parent=5 // pred_check
      _
    $region42: #{tpu_custom_call.1} parent=5 // pred_check_branch
      %253 = sbr.rel (%p250) target = $region44
    $region43: #{tpu_custom_call.1} parent=5 // pred_region
      %s254 = ssub.s32 %s12, 1
      %s255 = smul.u32 16, %s22
      %p256 = scmp.lt.s32.totalorder %s21, 1
      %s257 = scalar_select %p256, %s21, 1
      %p258 = scmp.lt.s32.totalorder %s255, 31
      %s259 = scalar_select %p258, %s255, 31
      %s260 = smul.addr %s257, 32
      %s261 = sadd.s32 %s259, %s260
      %s262 = smul.addr %s261, 8
      %s263 = scalar_lea.vmem %s0, %s262
      %p264 = pneg %p52
      %p265 = pneg %p49
      %p266 = scmp.lt.s32.totalorder %s21, 1
      %s267 = scalar_select %p266, %s21, 1
      %p268 = scmp.lt.s32.totalorder %s22, 1
      %s269 = scalar_select %p268, %s22, 1
      %s270 = smul.addr %s269, 4
      %s271 = smul.addr %s267, 8
      %s272 = sadd.s32 %s270, %s271
      %s273 = smul.addr %s272, 8
      %s274 = scalar_lea.vmem %s1, %s273
      %p275 = pneg %p80
      %p276 = pneg %p77
      %p277 = pneg %p101
      %p278 = pneg %p98
      %p279 = pneg %p122
      %p280 = pneg %p119
      %p281 = pneg %p143
      %p282 = pneg %p140
      %p283 = pneg %p164
      %p284 = pneg %p161
      %p285 = pneg %p192
      %p286 = pneg %p189
      %s287 = smul.u32 16, %s22
      %p288 = scmp.lt.s32.totalorder %s21, 1
      %s289 = scalar_select %p288, %s21, 1
      %p290 = scmp.lt.s32.totalorder %s287, 31
      %s291 = scalar_select %p290, %s287, 31
      %s292 = smul.addr %s289, 32
      %s293 = sadd.s32 %s291, %s292
      %s294 = smul.addr %s293, 8
      %s295 = scalar_lea.vmem %s6, %s294
      %s296 = smul.u32 16, %s22
      %p297 = scmp.lt.s32.totalorder %s21, 1
      %s298 = scalar_select %p297, %s21, 1
      %p299 = scmp.lt.s32.totalorder %s296, 31
      %s300 = scalar_select %p299, %s296, 31
      %s301 = smul.addr %s298, 32
      %s302 = sadd.s32 %s300, %s301
      %s303 = smul.addr %s302, 8
      %s304 = scalar_lea.vmem %s0, %s303
      %s305 = smul.u32 16, %s22
      %p306 = scmp.lt.s32.totalorder %s21, 1
      %s307 = scalar_select %p306, %s21, 1
      %p308 = scmp.lt.s32.totalorder %s22, 1
      %s309 = scalar_select %p308, %s22, 1
      %s310 = smul.addr %s309, 4
      %s311 = smul.addr %s307, 8
      %s312 = sadd.s32 %s310, %s311
      %s313 = smul.addr %s312, 8
      %s314 = scalar_lea.vmem %s1, %s313
      %s315 = smul.u32 16, %s22
      %p316 = scmp.lt.s32.totalorder %s21, 1
      %s317 = scalar_select %p316, %s21, 1
      %p318 = scmp.lt.s32.totalorder %s315, 31
      %s319 = scalar_select %p318, %s315, 31
      %s320 = smul.addr %s317, 32
      %s321 = sadd.s32 %s319, %s320
      %s322 = smul.addr %s321, 8
      %s323 = scalar_lea.vmem %s6, %s322
      %s324 = smul.u32 16, %s22
      %v326 = vld [vmem:[%s314] sm:$0xff]
      %v327 = vld [vmem:[%s314 + $0x8] sm:$0xff]
      %v328 = vld [vmem:[%s304] sm:$0xff]
      %v329 = vld [vmem:[%s304 + $0x8] sm:$0xff]
      %v330 = vld [vmem:[%s304 + $0x10] sm:$0xff]
      %v331 = vld [vmem:[%s304 + $0x18] sm:$0xff]
      %v332 = vld [vmem:[%s304 + $0x20] sm:$0xff]
      %v333 = vld [vmem:[%s304 + $0x28] sm:$0xff]
      %v334 = vld [vmem:[%s304 + $0x30] sm:$0xff]
      %v335 = vld [vmem:[%s304 + $0x38] sm:$0xff]
      %v336 = vld [vmem:[%s304 + $0x40] sm:$0xff]
      %v337 = vld [vmem:[%s304 + $0x48] sm:$0xff]
      %v338 = vld [vmem:[%s304 + $0x50] sm:$0xff]
      %v339 = vld [vmem:[%s304 + $0x58] sm:$0xff]
      %v340 = vld [vmem:[%s304 + $0x60] sm:$0xff]
      %v341 = vld [vmem:[%s304 + $0x68] sm:$0xff]
      %v342 = vld [vmem:[%s304 + $0x70] sm:$0xff]
      %v343 = vld [vmem:[%s304 + $0x78] sm:$0xff]
      %v344 = vld [vmem:[%s314 + $0x10] sm:$0xff]
      %v345 = vld [vmem:[%s314 + $0x18] sm:$0xff]
      %v346 = vpack.c.bf16 %v327, %v326
      %v347 = vpack.c.bf16 %v329, %v328
      %v348 = vpack.c.bf16 %v331, %v330
      %v349 = vpack.c.bf16 %v333, %v332
      %v350 = vpack.c.bf16 %v335, %v334
      %v351 = vpack.c.bf16 %v337, %v336
      %v352 = vpack.c.bf16 %v339, %v338
      %v353 = vpack.c.bf16 %v341, %v340
      %v354 = vpack.c.bf16 %v343, %v342
      %v355 = vpack.c.bf16 %v345, %v344
      %v356 = vld [vmem:[%s2] sm:$0x3]
      %v357 = vld [vmem:[%s3] sm:$0x1]
      %v359 = vperm.slane %v357, 0
      %vm361 = vcmask 31744
      %v363 = vsel %vm361, %v346, 0
      %v366 = vsel %vm361, %v347, 0
      %v369 = vsel %vm361, %v348, 0
      %v372 = vsel %vm361, %v349, 0
      %v375 = vsel %vm361, %v350, 0
      %v378 = vsel %vm361, %v351, 0
      %v381 = vsel %vm361, %v352, 0
      %v384 = vsel %vm361, %v353, 0
      %v387 = vsel %vm361, %v354, 0
      %v390 = vsel %vm361, %v355, 0
      %vm392 = vcmask 1041408
      %v394 = vsel %vm392, %v356, 0
      %396 = vmatpush.bf16.msra.mxu0 0
      %397 = vmatpush.bf16.msra.mxu0 0
      %398 = vmatpush.bf16.msra.mxu0 0
      %399 = vmatpush.bf16.msra.mxu0 0
      %400 = vmatpush.bf16.msra.mxu0 0
      %401 = vmatpush.bf16.msra.mxu0 0
      %402 = vmatpush.bf16.msra.mxu0 0
      %403 = vmatpush.bf16.msra.mxu0 %v394
      %404 = vmatmul.bf16.gmra.mxu0 %v363
      %v405 = vpop.f32.mrf.mxu0
      %v406 = vadd.f32 %v359, %v405
      %v407 = vpop.f32.mrf.mxu0
      %v408 = vadd.f32 %v359, %v407
      %409 = vmatmul.bf16.gmra.mxu0 %v366
      %v410 = vpop.f32.mrf.mxu0
      %v411 = vadd.f32 %v359, %v410
      %v412 = vpop.f32.mrf.mxu0
      %v413 = vadd.f32 %v359, %v412
      %414 = vmatmul.bf16.gmra.mxu0 %v369
      %v415 = vpop.f32.mrf.mxu0
      %v416 = vadd.f32 %v359, %v415
      %v417 = vpop.f32.mrf.mxu0
      %v418 = vadd.f32 %v359, %v417
      %419 = vmatmul.bf16.gmra.mxu0 %v372
      %v420 = vpop.f32.mrf.mxu0
      %v421 = vadd.f32 %v359, %v420
      %v422 = vpop.f32.mrf.mxu0
      %v423 = vadd.f32 %v359, %v422
      %424 = vmatmul.bf16.gmra.mxu0 %v375
      %v425 = vpop.f32.mrf.mxu0
      %v426 = vadd.f32 %v359, %v425
      %v427 = vpop.f32.mrf.mxu0
      %v428 = vadd.f32 %v359, %v427
      %429 = vmatmul.bf16.gmra.mxu0 %v378
      %v430 = vpop.f32.mrf.mxu0
      %v431 = vadd.f32 %v359, %v430
      %v432 = vpop.f32.mrf.mxu0
      %v433 = vadd.f32 %v359, %v432
      %434 = vmatmul.bf16.gmra.mxu0 %v381
      %v435 = vpop.f32.mrf.mxu0
      %v436 = vadd.f32 %v359, %v435
      %v437 = vpop.f32.mrf.mxu0
      %v438 = vadd.f32 %v359, %v437
      %439 = vmatmul.bf16.gmra.mxu0 %v384
      %v440 = vpop.f32.mrf.mxu0
      %v441 = vadd.f32 %v359, %v440
      %v442 = vpop.f32.mrf.mxu0
      %v443 = vadd.f32 %v359, %v442
      %444 = vmatmul.bf16.gmra.mxu0 %v387
      %v445 = vpop.f32.mrf.mxu0
      %v446 = vadd.f32 %v359, %v445
      %v447 = vpop.f32.mrf.mxu0
      %v448 = vadd.f32 %v359, %v447
      %449 = vmatmul.bf16.gmra.mxu0 %v390
      %v450 = vpop.f32.mrf.mxu0
      %v451 = vadd.f32 %v359, %v450
      %v452 = vpop.f32.mrf.mxu0
      %v453 = vadd.f32 %v359, %v452
      %454 = vdwg.mxu0
      %vm455 = vcmp.ge.f32.partialorder %v406, 0.0
      %vm456 = vcmp.ge.f32.partialorder %v408, 0.0
      %vm457 = vcmp.ge.f32.partialorder %v411, 0.0
      %vm458 = vcmp.ge.f32.partialorder %v413, 0.0
      %vm459 = vcmp.ge.f32.partialorder %v416, 0.0
      %vm460 = vcmp.ge.f32.partialorder %v418, 0.0
      %vm461 = vcmp.ge.f32.partialorder %v421, 0.0
      %vm462 = vcmp.ge.f32.partialorder %v423, 0.0
      %vm463 = vcmp.ge.f32.partialorder %v426, 0.0
      %vm464 = vcmp.ge.f32.partialorder %v428, 0.0
      %vm465 = vcmp.ge.f32.partialorder %v431, 0.0
      %vm466 = vcmp.ge.f32.partialorder %v433, 0.0
      %vm467 = vcmp.ge.f32.partialorder %v436, 0.0
      %vm468 = vcmp.ge.f32.partialorder %v438, 0.0
      %vm469 = vcmp.ge.f32.partialorder %v441, 0.0
      %vm470 = vcmp.ge.f32.partialorder %v443, 0.0
      %vm471 = vcmp.ge.f32.partialorder %v446, 0.0
      %vm472 = vcmp.ge.f32.partialorder %v448, 0.0
      %vm473 = vcmp.ge.f32.partialorder %v451, 0.0
      %vm474 = vcmp.ge.f32.partialorder %v453, 0.0
      %v475 = vmul.f32 %v406, 0.01
      %v476 = vmul.f32 %v408, 0.01
      %v477 = vmul.f32 %v411, 0.01
      %v478 = vmul.f32 %v413, 0.01
      %v479 = vmul.f32 %v416, 0.01
      %v480 = vmul.f32 %v418, 0.01
      %v481 = vmul.f32 %v421, 0.01
      %v482 = vmul.f32 %v423, 0.01
      %v483 = vmul.f32 %v426, 0.01
      %v484 = vmul.f32 %v428, 0.01
      %v485 = vmul.f32 %v431, 0.01
      %v486 = vmul.f32 %v433, 0.01
      %v487 = vmul.f32 %v436, 0.01
      %v488 = vmul.f32 %v438, 0.01
      %v489 = vmul.f32 %v441, 0.01
      %v490 = vmul.f32 %v443, 0.01
      %v491 = vmul.f32 %v446, 0.01
      %v492 = vmul.f32 %v448, 0.01
      %v493 = vmul.f32 %v451, 0.01
      %v494 = vmul.f32 %v453, 0.01
      %v495 = vsel %vm455, %v406, %v475
      %v496 = vsel %vm456, %v408, %v476
      %v497 = vsel %vm457, %v411, %v477
      %v498 = vsel %vm458, %v413, %v478
      %v499 = vsel %vm459, %v416, %v479
      %v500 = vsel %vm460, %v418, %v480
      %v501 = vsel %vm461, %v421, %v481
      %v502 = vsel %vm462, %v423, %v482
      %v503 = vsel %vm463, %v426, %v483
      %v504 = vsel %vm464, %v428, %v484
      %v505 = vsel %vm465, %v431, %v485
      %v506 = vsel %vm466, %v433, %v486
      %v507 = vsel %vm467, %v436, %v487
      %v508 = vsel %vm468, %v438, %v488
      %v509 = vsel %vm469, %v441, %v489
      %v510 = vsel %vm470, %v443, %v490
      %v511 = vsel %vm471, %v446, %v491
      %v512 = vsel %vm472, %v448, %v492
      %v513 = vsel %vm473, %v451, %v493
      %v514 = vsel %vm474, %v453, %v494
      %v515 = vpack.c.bf16 %v495, %v495
      %v516 = vpack.c.bf16 %v496, %v496
      %v517 = vpack.c.bf16 %v497, %v497
      %v518 = vpack.c.bf16 %v498, %v498
      %v519 = vpack.c.bf16 %v499, %v499
      %v520 = vpack.c.bf16 %v500, %v500
      %v521 = vpack.c.bf16 %v501, %v501
      %v522 = vpack.c.bf16 %v502, %v502
      %v523 = vpack.c.bf16 %v503, %v503
      %v524 = vpack.c.bf16 %v504, %v504
      %v525 = vpack.c.bf16 %v505, %v505
      %v526 = vpack.c.bf16 %v506, %v506
      %v527 = vpack.c.bf16 %v507, %v507
      %v528 = vpack.c.bf16 %v508, %v508
      %v529 = vpack.c.bf16 %v509, %v509
      %v530 = vpack.c.bf16 %v510, %v510
      %v531 = vpack.c.bf16 %v511, %v511
      %v532 = vpack.c.bf16 %v512, %v512
      %v533 = vpack.c.bf16 %v513, %v513
      %v534 = vpack.c.bf16 %v514, %v514
      %p535 = scmp.gt.s32.totalorder %s22, 0
      %s536 = scalar_select %p535, 1, 0
      %v537 = vstv %s536
      %vm538 = vcmp.eq.s32.totalorder %v537, 1
      %p539 = scmp.lt.s32.totalorder %s22, 1
      %s540 = scalar_select %p539, 1, 0
      %v541 = vstv %s540
      %vm542 = vcmp.eq.s32.totalorder %v541, 1
      %v543 = vsel %vm538, 1, 0
      %v544 = vsel %vm542, 1, 0
      %vm545 = vcmp.eq.s32.totalorder %v543, 1
      %vm546 = vcmp.eq.s32.totalorder %v544, 1
      %v547 = vsel %vm545, %v515, 0
      %v548 = vsel %vm545, %v516, 0
      %v549 = vsel 1, %v517, 0
      %v550 = vsel 1, %v518, 0
      %v551 = vsel 1, %v519, 0
      %v552 = vsel 1, %v520, 0
      %v553 = vsel 1, %v521, 0
      %v554 = vsel 1, %v522, 0
      %v555 = vsel 1, %v523, 0
      %v556 = vsel 1, %v524, 0
      %v557 = vsel 1, %v525, 0
      %v558 = vsel 1, %v526, 0
      %v559 = vsel 1, %v527, 0
      %v560 = vsel 1, %v528, 0
      %v561 = vsel 1, %v529, 0
      %v562 = vsel 1, %v530, 0
      %v563 = vsel 1, %v531, 0
      %v564 = vsel 1, %v532, 0
      %v565 = vsel %vm546, %v533, 0
      %v566 = vsel %vm546, %v534, 0
      %v587 = vunpack.c.l.b16 %v547
      %v588 = vunpack.c.l.b16 %v548
      %v589 = vunpack.c.l.b16 %v549
      %v590 = vunpack.c.l.b16 %v550
      %v591 = vunpack.c.l.b16 %v551
      %v592 = vunpack.c.l.b16 %v552
      %v593 = vunpack.c.l.b16 %v553
      %v594 = vunpack.c.l.b16 %v554
      %v595 = vunpack.c.l.b16 %v555
      %v596 = vunpack.c.l.b16 %v556
      %v597 = vunpack.c.l.b16 %v557
      %v598 = vunpack.c.l.b16 %v558
      %v599 = vunpack.c.l.b16 %v559
      %v600 = vunpack.c.l.b16 %v560
      %v601 = vunpack.c.l.b16 %v561
      %v602 = vunpack.c.l.b16 %v562
      %v603 = vunpack.c.l.b16 %v563
      %v604 = vunpack.c.l.b16 %v564
      %v605 = vunpack.c.l.b16 %v565
      %v606 = vunpack.c.l.b16 %v566
      %v607 = vpack.c.b16 %v588, %v587
      %v608 = vpack.c.b16 %v590, %v589
      %v609 = vpack.c.b16 %v592, %v591
      %v610 = vpack.c.b16 %v594, %v593
      %v611 = vpack.c.b16 %v596, %v595
      %v612 = vpack.c.b16 %v598, %v597
      %v613 = vpack.c.b16 %v600, %v599
      %v614 = vpack.c.b16 %v602, %v601
      %v615 = vpack.c.b16 %v604, %v603
      %v616 = vpack.c.b16 %v606, %v605
      %v618 = vshrl.u32 %v607, 16
      %v620 = vrot.slane %v618, 7
      %v621 = vshll.u32 %v607, 16
      %v623 = vor.u32 %v620, %v621
      %v625 = vshrl.u32 %v608, 16
      %v627 = vrot.slane %v625, 7
      %v628 = vshll.u32 %v608, 16
      %v630 = vor.u32 %v627, %v628
      %v632 = vshrl.u32 %v609, 16
      %v634 = vrot.slane %v632, 7
      %v635 = vshll.u32 %v609, 16
      %v637 = vor.u32 %v634, %v635
      %v639 = vshrl.u32 %v610, 16
      %v641 = vrot.slane %v639, 7
      %v642 = vshll.u32 %v610, 16
      %v644 = vor.u32 %v641, %v642
      %v646 = vshrl.u32 %v611, 16
      %v648 = vrot.slane %v646, 7
      %v649 = vshll.u32 %v611, 16
      %v651 = vor.u32 %v648, %v649
      %v653 = vshrl.u32 %v612, 16
      %v655 = vrot.slane %v653, 7
      %v656 = vshll.u32 %v612, 16
      %v658 = vor.u32 %v655, %v656
      %v660 = vshrl.u32 %v613, 16
      %v662 = vrot.slane %v660, 7
      %v663 = vshll.u32 %v613, 16
      %v665 = vor.u32 %v662, %v663
      %v667 = vshrl.u32 %v614, 16
      %v669 = vrot.slane %v667, 7
      %v670 = vshll.u32 %v614, 16
      %v672 = vor.u32 %v669, %v670
      %v674 = vshrl.u32 %v615, 16
      %v676 = vrot.slane %v674, 7
      %v677 = vshll.u32 %v615, 16
      %v679 = vor.u32 %v676, %v677
      %v681 = vshrl.u32 %v616, 16
      %v683 = vrot.slane %v681, 7
      %v684 = vshll.u32 %v616, 16
      %v686 = vor.u32 %v683, %v684
      %vm697 = vcmask 1040384
      %vm698 = vsmask.f32 256
      %vm699 = vmand %vm697, %vm698
      %v700 = vsel %vm699, 0, %v623
      %v701 = vsel %vm699, 0, %v630
      %v702 = vsel %vm699, 0, %v637
      %v703 = vsel %vm699, 0, %v644
      %v704 = vsel %vm699, 0, %v651
      %v705 = vsel %vm699, 0, %v658
      %v706 = vsel %vm699, 0, %v665
      %v707 = vsel %vm699, 0, %v672
      %v708 = vsel %vm699, 0, %v679
      %v709 = vsel %vm699, 0, %v686
      %v710 = vrot.slane %v621, 1
      %v711 = vor.u32 %v618, %v710
      %v712 = vrot.slane %v628, 1
      %v713 = vor.u32 %v625, %v712
      %v714 = vrot.slane %v635, 1
      %v715 = vor.u32 %v632, %v714
      %v716 = vrot.slane %v642, 1
      %v717 = vor.u32 %v639, %v716
      %v718 = vrot.slane %v649, 1
      %v719 = vor.u32 %v646, %v718
      %v720 = vrot.slane %v656, 1
      %v721 = vor.u32 %v653, %v720
      %v722 = vrot.slane %v663, 1
      %v723 = vor.u32 %v660, %v722
      %v724 = vrot.slane %v670, 1
      %v725 = vor.u32 %v667, %v724
      %v726 = vrot.slane %v677, 1
      %v727 = vor.u32 %v674, %v726
      %v728 = vrot.slane %v684, 1
      %v729 = vor.u32 %v681, %v728
      %vm740 = vcmask 1047552
      %vm741 = vsmask.f32 7424
      %vm742 = vmand %vm740, %vm741
      %v743 = vsel %vm742, %v711, 0
      %v744 = vsel %vm742, %v713, 0
      %v745 = vsel %vm742, %v715, 0
      %v746 = vsel %vm742, %v717, 0
      %v747 = vsel %vm742, %v719, 0
      %v748 = vsel %vm742, %v721, 0
      %v749 = vsel %vm742, %v723, 0
      %v750 = vsel %vm742, %v725, 0
      %v751 = vsel %vm742, %v727, 0
      %v752 = vsel %vm742, %v729, 0
      %753 = vrot.lane.b32.xlu0 %v607, 2
      %v754 = vpop.permute.xlu0 %753
      %755 = vrot.lane.b32.xlu0 %v608, 2
      %v756 = vpop.permute.xlu0 %755
      %757 = vrot.lane.b32.xlu0 %v609, 2
      %v758 = vpop.permute.xlu0 %757
      %759 = vrot.lane.b32.xlu0 %v610, 2
      %v760 = vpop.permute.xlu0 %759
      %761 = vrot.lane.b32.xlu0 %v611, 2
      %v762 = vpop.permute.xlu0 %761
      %763 = vrot.lane.b32.xlu0 %v612, 2
      %v764 = vpop.permute.xlu0 %763
      %765 = vrot.lane.b32.xlu0 %v613, 2
      %v766 = vpop.permute.xlu0 %765
      %767 = vrot.lane.b32.xlu0 %v614, 2
      %v768 = vpop.permute.xlu0 %767
      %769 = vrot.lane.b32.xlu0 %v615, 2
      %v770 = vpop.permute.xlu0 %769
      %771 = vrot.lane.b32.xlu0 %v616, 2
      %v772 = vpop.permute.xlu0 %771
      %783 = vrot.lane.b32.xlu0 %v743, 4
      %v784 = vpop.permute.xlu0 %783
      %785 = vrot.lane.b32.xlu0 %v744, 4
      %v786 = vpop.permute.xlu0 %785
      %787 = vrot.lane.b32.xlu0 %v745, 4
      %v788 = vpop.permute.xlu0 %787
      %789 = vrot.lane.b32.xlu0 %v746, 4
      %v790 = vpop.permute.xlu0 %789
      %791 = vrot.lane.b32.xlu0 %v747, 4
      %v792 = vpop.permute.xlu0 %791
      %793 = vrot.lane.b32.xlu0 %v748, 4
      %v794 = vpop.permute.xlu0 %793
      %795 = vrot.lane.b32.xlu0 %v749, 4
      %v796 = vpop.permute.xlu0 %795
      %797 = vrot.lane.b32.xlu0 %v750, 4
      %v798 = vpop.permute.xlu0 %797
      %799 = vrot.lane.b32.xlu0 %v751, 4
      %v800 = vpop.permute.xlu0 %799
      %801 = vrot.lane.b32.xlu0 %v752, 4
      %v802 = vpop.permute.xlu0 %801
      %vm803 = vcmask 15360
      %v806 = vsel %vm803, %v700, %v754
      %v809 = vsel %vm803, %v701, %v756
      %v812 = vsel %vm803, %v702, %v758
      %v815 = vsel %vm803, %v703, %v760
      %v818 = vsel %vm803, %v704, %v762
      %v821 = vsel %vm803, %v705, %v764
      %v824 = vsel %vm803, %v706, %v766
      %v827 = vsel %vm803, %v707, %v768
      %v830 = vsel %vm803, %v708, %v770
      %v833 = vsel %vm803, %v709, %v772
      %v835 = vsel %vm361, %v806, %v784
      %v837 = vsel %vm361, %v809, %v786
      %v839 = vsel %vm361, %v812, %v788
      %v841 = vsel %vm361, %v815, %v790
      %v843 = vsel %vm361, %v818, %v792
      %v845 = vsel %vm361, %v821, %v794
      %v847 = vsel %vm361, %v824, %v796
      %v849 = vsel %vm361, %v827, %v798
      %v851 = vsel %vm361, %v830, %v800
      %v853 = vsel %vm361, %v833, %v802
      %v854 = vld [vmem:[%s4] sm:$0x7]
      %s855 = scalar_lea.vmem %s4, 4
      %v856 = vld [vmem:[%s855] sm:$0x7]
      %vm857 = vcmask 48128
      %v858 = vsel %vm857, %v837, 0
      %v860 = vsel %vm857, %v839, 0
      %v862 = vsel %vm857, %v841, 0
      %v864 = vsel %vm857, %v843, 0
      %v866 = vsel %vm857, %v845, 0
      %v868 = vsel %vm857, %v847, 0
      %v870 = vsel %vm857, %v849, 0
      %v872 = vsel %vm857, %v851, 0
      %vm874 = vcmask 1042432
      %v876 = vsel %vm874, %v856, 0
      %878 = vmatpush.bf16.msra.mxu0 0
      %879 = vmatpush.bf16.msra.mxu0 0
      %880 = vmatpush.bf16.msra.mxu0 0
      %881 = vmatpush.bf16.msra.mxu0 0
      %882 = vmatpush.bf16.msra.mxu0 0
      %883 = vmatpush.bf16.msra.mxu0 0
      %884 = vmatpush.bf16.msra.mxu0 0
      %885 = vmatpush.bf16.msra.mxu0 %v876
      %886 = vmatmul.bf16.gmra.mxu0 %v858
      %v887 = vpop.f32.mrf.mxu0
      %v888 = vadd.f32 0.0, %v887
      %v889 = vpop.f32.mrf.mxu0
      %v890 = vadd.f32 0.0, %v889
      %891 = vmatmul.bf16.gmra.mxu0 %v860
      %v892 = vpop.f32.mrf.mxu0
      %v893 = vadd.f32 0.0, %v892
      %v894 = vpop.f32.mrf.mxu0
      %v895 = vadd.f32 0.0, %v894
      %896 = vmatmul.bf16.gmra.mxu0 %v862
      %v897 = vpop.f32.mrf.mxu0
      %v898 = vadd.f32 0.0, %v897
      %v899 = vpop.f32.mrf.mxu0
      %v900 = vadd.f32 0.0, %v899
      %901 = vmatmul.bf16.gmra.mxu0 %v864
      %v902 = vpop.f32.mrf.mxu0
      %v903 = vadd.f32 0.0, %v902
      %v904 = vpop.f32.mrf.mxu0
      %v905 = vadd.f32 0.0, %v904
      %906 = vmatmul.bf16.gmra.mxu0 %v866
      %v907 = vpop.f32.mrf.mxu0
      %v908 = vadd.f32 0.0, %v907
      %v909 = vpop.f32.mrf.mxu0
      %v910 = vadd.f32 0.0, %v909
      %911 = vmatmul.bf16.gmra.mxu0 %v868
      %v912 = vpop.f32.mrf.mxu0
      %v913 = vadd.f32 0.0, %v912
      %v914 = vpop.f32.mrf.mxu0
      %v915 = vadd.f32 0.0, %v914
      %916 = vmatmul.bf16.gmra.mxu0 %v870
      %v917 = vpop.f32.mrf.mxu0
      %v918 = vadd.f32 0.0, %v917
      %v919 = vpop.f32.mrf.mxu0
      %v920 = vadd.f32 0.0, %v919
      %921 = vmatmul.bf16.gmra.mxu0 %v872
      %v922 = vpop.f32.mrf.mxu0
      %v923 = vadd.f32 0.0, %v922
      %v924 = vpop.f32.mrf.mxu0
      %v925 = vadd.f32 0.0, %v924
      %926 = vdwg.mxu0
      %v927 = vsel %vm857, %v835, 0
      %v930 = vsel %vm874, %v854, 0
      %932 = vmatpush.bf16.msra.mxu0 0
      %933 = vmatpush.bf16.msra.mxu0 0
      %934 = vmatpush.bf16.msra.mxu0 0
      %935 = vmatpush.bf16.msra.mxu0 0
      %936 = vmatpush.bf16.msra.mxu0 0
      %937 = vmatpush.bf16.msra.mxu0 0
      %938 = vmatpush.bf16.msra.mxu0 0
      %939 = vmatpush.bf16.msra.mxu0 %v930
      %940 = vmatmul.bf16.gmra.mxu0 %v927
      %v941 = vpop.f32.mrf.mxu0
      %v942 = vadd.f32 %v888, %v941
      %v943 = vpop.f32.mrf.mxu0
      %v944 = vadd.f32 %v890, %v943
      %945 = vmatmul.bf16.gmra.mxu0 %v858
      %v946 = vpop.f32.mrf.mxu0
      %v947 = vadd.f32 %v893, %v946
      %v948 = vpop.f32.mrf.mxu0
      %v949 = vadd.f32 %v895, %v948
      %950 = vmatmul.bf16.gmra.mxu0 %v860
      %v951 = vpop.f32.mrf.mxu0
      %v952 = vadd.f32 %v898, %v951
      %v953 = vpop.f32.mrf.mxu0
      %v954 = vadd.f32 %v900, %v953
      %955 = vmatmul.bf16.gmra.mxu0 %v862
      %v956 = vpop.f32.mrf.mxu0
      %v957 = vadd.f32 %v903, %v956
      %v958 = vpop.f32.mrf.mxu0
      %v959 = vadd.f32 %v905, %v958
      %960 = vmatmul.bf16.gmra.mxu0 %v864
      %v961 = vpop.f32.mrf.mxu0
      %v962 = vadd.f32 %v908, %v961
      %v963 = vpop.f32.mrf.mxu0
      %v964 = vadd.f32 %v910, %v963
      %965 = vmatmul.bf16.gmra.mxu0 %v866
      %v966 = vpop.f32.mrf.mxu0
      %v967 = vadd.f32 %v913, %v966
      %v968 = vpop.f32.mrf.mxu0
      %v969 = vadd.f32 %v915, %v968
      %970 = vmatmul.bf16.gmra.mxu0 %v868
      %v971 = vpop.f32.mrf.mxu0
      %v972 = vadd.f32 %v918, %v971
      %v973 = vpop.f32.mrf.mxu0
      %v974 = vadd.f32 %v920, %v973
      %975 = vmatmul.bf16.gmra.mxu0 %v870
      %v976 = vpop.f32.mrf.mxu0
      %v977 = vadd.f32 %v923, %v976
      %v978 = vpop.f32.mrf.mxu0
      %v979 = vadd.f32 %v925, %v978
      %980 = vdwg.mxu0
      %s981 = scalar_lea.vmem %s4, 8
      %v982 = vld [vmem:[%s981] sm:$0x7]
      %v983 = vsel %vm857, %v853, 0
      %v986 = vsel %vm874, %v982, 0
      %988 = vmatpush.bf16.msra.mxu0 0
      %989 = vmatpush.bf16.msra.mxu0 0
      %990 = vmatpush.bf16.msra.mxu0 0
      %991 = vmatpush.bf16.msra.mxu0 0
      %992 = vmatpush.bf16.msra.mxu0 0
      %993 = vmatpush.bf16.msra.mxu0 0
      %994 = vmatpush.bf16.msra.mxu0 0
      %995 = vmatpush.bf16.msra.mxu0 %v986
      %996 = vmatmul.bf16.gmra.mxu0 %v860
      %v997 = vpop.f32.mrf.mxu0
      %v998 = vadd.f32 0.0, %v997
      %v999 = vpop.f32.mrf.mxu0
      %v1000 = vadd.f32 0.0, %v999
      %1001 = vmatmul.bf16.gmra.mxu0 %v862
      %v1002 = vpop.f32.mrf.mxu0
      %v1003 = vadd.f32 0.0, %v1002
      %v1004 = vpop.f32.mrf.mxu0
      %v1005 = vadd.f32 0.0, %v1004
      %1006 = vmatmul.bf16.gmra.mxu0 %v864
      %v1007 = vpop.f32.mrf.mxu0
      %v1008 = vadd.f32 0.0, %v1007
      %v1009 = vpop.f32.mrf.mxu0
      %v1010 = vadd.f32 0.0, %v1009
      %1011 = vmatmul.bf16.gmra.mxu0 %v866
      %v1012 = vpop.f32.mrf.mxu0
      %v1013 = vadd.f32 0.0, %v1012
      %v1014 = vpop.f32.mrf.mxu0
      %v1015 = vadd.f32 0.0, %v1014
      %1016 = vmatmul.bf16.gmra.mxu0 %v868
      %v1017 = vpop.f32.mrf.mxu0
      %v1018 = vadd.f32 0.0, %v1017
      %v1019 = vpop.f32.mrf.mxu0
      %v1020 = vadd.f32 0.0, %v1019
      %1021 = vmatmul.bf16.gmra.mxu0 %v870
      %v1022 = vpop.f32.mrf.mxu0
      %v1023 = vadd.f32 0.0, %v1022
      %v1024 = vpop.f32.mrf.mxu0
      %v1025 = vadd.f32 0.0, %v1024
      %1026 = vmatmul.bf16.gmra.mxu0 %v872
      %v1027 = vpop.f32.mrf.mxu0
      %v1028 = vadd.f32 0.0, %v1027
      %v1029 = vpop.f32.mrf.mxu0
      %v1030 = vadd.f32 0.0, %v1029
      %1031 = vmatmul.bf16.gmra.mxu0 %v983
      %v1032 = vpop.f32.mrf.mxu0
      %v1033 = vadd.f32 0.0, %v1032
      %v1034 = vpop.f32.mrf.mxu0
      %v1035 = vadd.f32 0.0, %v1034
      %1036 = vdwg.mxu0
      %v1037 = vadd.f32 %v942, %v998
      %v1038 = vadd.f32 %v944, %v1000
      %v1039 = vadd.f32 %v947, %v1003
      %v1040 = vadd.f32 %v949, %v1005
      %v1041 = vadd.f32 %v952, %v1008
      %v1042 = vadd.f32 %v954, %v1010
      %v1043 = vadd.f32 %v957, %v1013
      %v1044 = vadd.f32 %v959, %v1015
      %v1045 = vadd.f32 %v962, %v1018
      %v1046 = vadd.f32 %v964, %v1020
      %v1047 = vadd.f32 %v967, %v1023
      %v1048 = vadd.f32 %v969, %v1025
      %v1049 = vadd.f32 %v972, %v1028
      %v1050 = vadd.f32 %v974, %v1030
      %v1051 = vadd.f32 %v977, %v1033
      %v1052 = vadd.f32 %v979, %v1035
      %v1053 = vld [vmem:[%s5] sm:$0x1]
      %v1055 = vperm.slane %v1053, 0
      %v1057 = vadd.f32 %v1037, %v1055
      %v1058 = vadd.f32 %v1038, %v1055
      %v1059 = vadd.f32 %v1039, %v1055
      %v1060 = vadd.f32 %v1040, %v1055
      %v1061 = vadd.f32 %v1041, %v1055
      %v1062 = vadd.f32 %v1042, %v1055
      %v1063 = vadd.f32 %v1043, %v1055
      %v1064 = vadd.f32 %v1044, %v1055
      %v1065 = vadd.f32 %v1045, %v1055
      %v1066 = vadd.f32 %v1046, %v1055
      %v1067 = vadd.f32 %v1047, %v1055
      %v1068 = vadd.f32 %v1048, %v1055
      %v1069 = vadd.f32 %v1049, %v1055
      %v1070 = vadd.f32 %v1050, %v1055
      %v1071 = vadd.f32 %v1051, %v1055
      %v1072 = vadd.f32 %v1052, %v1055
      %vm1073 = vcmp.ge.f32.partialorder %v1057, 0.0
      %vm1074 = vcmp.ge.f32.partialorder %v1058, 0.0
      %vm1075 = vcmp.ge.f32.partialorder %v1059, 0.0
      %vm1076 = vcmp.ge.f32.partialorder %v1060, 0.0
      %vm1077 = vcmp.ge.f32.partialorder %v1061, 0.0
      %vm1078 = vcmp.ge.f32.partialorder %v1062, 0.0
      %vm1079 = vcmp.ge.f32.partialorder %v1063, 0.0
      %vm1080 = vcmp.ge.f32.partialorder %v1064, 0.0
      %vm1081 = vcmp.ge.f32.partialorder %v1065, 0.0
      %vm1082 = vcmp.ge.f32.partialorder %v1066, 0.0
      %vm1083 = vcmp.ge.f32.partialorder %v1067, 0.0
      %vm1084 = vcmp.ge.f32.partialorder %v1068, 0.0
      %vm1085 = vcmp.ge.f32.partialorder %v1069, 0.0
      %vm1086 = vcmp.ge.f32.partialorder %v1070, 0.0
      %vm1087 = vcmp.ge.f32.partialorder %v1071, 0.0
      %vm1088 = vcmp.ge.f32.partialorder %v1072, 0.0
      %v1089 = vmul.f32 %v1057, 0.01
      %v1090 = vmul.f32 %v1058, 0.01
      %v1091 = vmul.f32 %v1059, 0.01
      %v1092 = vmul.f32 %v1060, 0.01
      %v1093 = vmul.f32 %v1061, 0.01
      %v1094 = vmul.f32 %v1062, 0.01
      %v1095 = vmul.f32 %v1063, 0.01
      %v1096 = vmul.f32 %v1064, 0.01
      %v1097 = vmul.f32 %v1065, 0.01
      %v1098 = vmul.f32 %v1066, 0.01
      %v1099 = vmul.f32 %v1067, 0.01
      %v1100 = vmul.f32 %v1068, 0.01
      %v1101 = vmul.f32 %v1069, 0.01
      %v1102 = vmul.f32 %v1070, 0.01
      %v1103 = vmul.f32 %v1071, 0.01
      %v1104 = vmul.f32 %v1072, 0.01
      %v1105 = vsel %vm1073, %v1057, %v1089
      %v1106 = vsel %vm1074, %v1058, %v1090
      %v1107 = vsel %vm1075, %v1059, %v1091
      %v1108 = vsel %vm1076, %v1060, %v1092
      %v1109 = vsel %vm1077, %v1061, %v1093
      %v1110 = vsel %vm1078, %v1062, %v1094
      %v1111 = vsel %vm1079, %v1063, %v1095
      %v1112 = vsel %vm1080, %v1064, %v1096
      %v1113 = vsel %vm1081, %v1065, %v1097
      %v1114 = vsel %vm1082, %v1066, %v1098
      %v1115 = vsel %vm1083, %v1067, %v1099
      %v1116 = vsel %vm1084, %v1068, %v1100
      %v1117 = vsel %vm1085, %v1069, %v1101
      %v1118 = vsel %vm1086, %v1070, %v1102
      %v1119 = vsel %vm1087, %v1071, %v1103
      %v1120 = vsel %vm1088, %v1072, %v1104
      %v1121 = vadd.f32 %v1105, %v328
      %v1122 = vadd.f32 %v1106, %v329
      %v1123 = vadd.f32 %v1107, %v330
      %v1124 = vadd.f32 %v1108, %v331
      %v1125 = vadd.f32 %v1109, %v332
      %v1126 = vadd.f32 %v1110, %v333
      %v1127 = vadd.f32 %v1111, %v334
      %v1128 = vadd.f32 %v1112, %v335
      %v1129 = vadd.f32 %v1113, %v336
      %v1130 = vadd.f32 %v1114, %v337
      %v1131 = vadd.f32 %v1115, %v338
      %v1132 = vadd.f32 %v1116, %v339
      %v1133 = vadd.f32 %v1117, %v340
      %v1134 = vadd.f32 %v1118, %v341
      %v1135 = vadd.f32 %v1119, %v342
      %v1136 = vadd.f32 %v1120, %v343
      %1137 = vst.msk [vmem:[%s323] sm:$0xff] %vm361, %v1121
      %1138 = vst.msk [vmem:[%s323 + $0x8] sm:$0xff] %vm361, %v1122
      %1139 = vst.msk [vmem:[%s323 + $0x10] sm:$0xff] %vm361, %v1123
      %1140 = vst.msk [vmem:[%s323 + $0x18] sm:$0xff] %vm361, %v1124
      %1141 = vst.msk [vmem:[%s323 + $0x20] sm:$0xff] %vm361, %v1125
      %1142 = vst.msk [vmem:[%s323 + $0x28] sm:$0xff] %vm361, %v1126
      %1143 = vst.msk [vmem:[%s323 + $0x30] sm:$0xff] %vm361, %v1127
      %1144 = vst.msk [vmem:[%s323 + $0x38] sm:$0xff] %vm361, %v1128
      %1145 = vst.msk [vmem:[%s323 + $0x40] sm:$0xff] %vm361, %v1129
      %1146 = vst.msk [vmem:[%s323 + $0x48] sm:$0xff] %vm361, %v1130
      %1147 = vst.msk [vmem:[%s323 + $0x50] sm:$0xff] %vm361, %v1131
      %1148 = vst.msk [vmem:[%s323 + $0x58] sm:$0xff] %vm361, %v1132
      %1149 = vst.msk [vmem:[%s323 + $0x60] sm:$0xff] %vm361, %v1133
      %1150 = vst.msk [vmem:[%s323 + $0x68] sm:$0xff] %vm361, %v1134
      %1151 = vst.msk [vmem:[%s323 + $0x70] sm:$0xff] %vm361, %v1135
      %1152 = vst.msk [vmem:[%s323 + $0x78] sm:$0xff] %vm361, %v1136
      %s1153 = smul.u32 16, %s22
      %p1154 = scmp.lt.s32.totalorder %s21, 1
      %s1155 = scalar_select %p1154, %s21, 1
      %p1156 = scmp.lt.s32.totalorder %s1153, 31
      %s1157 = scalar_select %p1156, %s1153, 31
      %s1158 = smul.addr %s1155, 32
      %s1159 = sadd.s32 %s1157, %s1158
      %s1160 = smul.addr %s1159, 8
      %s1161 = scalar_lea.vmem %s6, %s1160
      // Predicated region
      $region45: #{tpu_custom_call.1} parent=43 // pred_check
        %p1162 = pneg %p189
      $region46: #{tpu_custom_call.1} parent=43 // pred_check_branch
        %1164 = sbr.rel (%p1162) target = $region48
      $region47: #{tpu_custom_call.1} parent=43 // pred_region
        %s1165 = smul.u32 16, %s22
      $region48: #{tpu_custom_call.1} parent=43 // pred_fallthru
        _
    $region44: #{tpu_custom_call.1} parent=5 // pred_fallthru
      _
    %p1166 = scmp.le.s32.totalorder 2, %s12
    // Predicated region
    $region49: #{tpu_custom_call.1} parent=5 // pred_check
      %p1167 = pneg %p1166
    $region50: #{tpu_custom_call.1} parent=5 // pred_check_branch
      %1169 = sbr.rel (%p1167) target = $region52
    $region51: #{tpu_custom_call.1} parent=5 // pred_region
      %s1170 = ssub.s32 %s12, 2
      // Predicated region
      $region53: #{tpu_custom_call.1} parent=51 // pred_check
        %p1171 = pneg %p195
      $region54: #{tpu_custom_call.1} parent=51 // pred_check_branch
        %1173 = sbr.rel (%p1171) target = $region56
      $region55: #{tpu_custom_call.1} parent=51 // pred_region
        %s1174 = smul.u32 16, %s24
        %p1175 = scmp.lt.s32.totalorder %s23, 1
        %s1176 = scalar_select %p1175, %s23, 1
        %p1177 = scmp.lt.s32.totalorder %s1174, 31
        %s1178 = scalar_select %p1177, %s1174, 31
        %s1179 = smul.addr %s1176, 32
        %s1180 = sadd.s32 %s1178, %s1179
        %s1181 = smul.addr %s1180, 8
        %s1182 = scalar_lea.vmem %s6, %s1181
      $region56: #{tpu_custom_call.1} parent=51 // pred_fallthru
        _
    $region52: #{tpu_custom_call.1} parent=5 // pred_fallthru
      _
  $region6: #{tpu_custom_call.1} parent=0 // loop_footer
    %s16 = sadd.s32 1, %s12
  $region7: #{tpu_custom_call.1} parent=0 // loop_footer_branch
    %11 = sbr.rel target = $region3
  $region8: #{tpu_custom_call.1} parent=0 // loop_exit
    _

</llo_original>
